<compile_context>
chip_gen: v7x
topology: tpu7x:2x2x1
jax: 0.10.0
libtpu: 0.0.40
codegen_flags: <defaults>
</compile_context>

<pallas_src>
import numpy as np
import jax
import jax.numpy as jnp
from jax.experimental import pallas as pl
from jax.experimental.pallas import tpu as pltpu

# ---- TFSpectrogram default config ----
SAMPLE_RATE = 16000
N_FFT = 512
WIN_LENGTH = 400
HOP_LENGTH = 160
EPS = 1e-8
PREEMPH = 0.97
POOL_F = 2                         # pool_freqs = (2, 1)
N_FREQ = N_FFT // 2                # 256
N_FREQ_POOLED = N_FREQ // POOL_F   # 128
# frame = 2.5 hops -> 3 hop rows per frame, with the tail rows of chunk 2 zeroed
N_CHUNKS = 3
K_FUSED = N_CHUNKS * HOP_LENGTH    # 480 (>= WIN_LENGTH)

_SQUEEZE = pl.Squeezed() if hasattr(pl, "Squeezed") else None


# ---------------- parameter construction (deterministic, in-script) -----------
def _hamming(n: int) -> np.ndarray:
    i = np.arange(n)
    return (0.54 - 0.46 * np.cos(2.0 * np.pi * i / (n - 1))).astype(np.float64)


def build_fused_dft_weight():
    """Fused [3*HOP, 2*N_FREQ] weight: cols [0,256)=real, [256,512)=imag.

    Row s multiplies frame sample s (s < WIN_LENGTH); rows [WIN, 3*HOP) are
    zero so the unused tail of the third hop row contributes nothing.
    Matches SpectralFeaturesTF.build() (hamming-windowed cos/sin DFT).
    """
    w = _hamming(WIN_LENGTH)
    s = np.arange(WIN_LENGTH, dtype=np.float64)[:, None]
    f = np.arange(N_FREQ, dtype=np.float64)[None, :]
    ang = 2.0 * np.pi * s * f / N_FFT
    fused = np.zeros((K_FUSED, 2 * N_FREQ), dtype=np.float32)
    fused[:WIN_LENGTH, :N_FREQ] = (np.cos(ang) * w[:, None]).astype(np.float32)
    fused[:WIN_LENGTH, N_FREQ:] = (np.sin(ang) * w[:, None]).astype(np.float32)
    return jnp.asarray(fused)


def build_pool_matrix():
    """AvgPool2d((2,1)) over frequency as a matmul: [N_FREQ, N_FREQ//2]."""
    p = np.zeros((N_FREQ, N_FREQ_POOLED), dtype=np.float32)
    j = np.arange(N_FREQ_POOLED)
    p[2 * j, j] = 0.5
    p[2 * j + 1, j] = 0.5
    return jnp.asarray(p)


# ---------------- glue (plain JAX): pre-emphasis only -------------------------
def preemphasis(x):
    # x: [B, L] f32; reflect-pad left by 1 then y[t] = x[t] - 0.97 * x[t-1]
    x_prev = jnp.concatenate([x[:, 1:2], x[:, :-1]], axis=1)
    return x - PREEMPH * x_prev


def _round_up(x, m):
    return ((x + m - 1) // m) * m


# ---------------- Pallas kernel: hot path --------------------------------------
def tf_spectrogram_kernel(hops_ref, w_ref, pool_ref, out_ref):
    # hops_ref: [n_hops_pad, HOP]      (whole utterance, DMA'd once per batch)
    # w_ref:    [3*HOP, 2*N_FREQ]      fused real|imag DFT weight
    # pool_ref: [N_FREQ, N_FREQ_POOLED]
    # out_ref:  [tile_t, N_FREQ_POOLED]
    tt = out_ref.shape[0]
    t0 = pl.multiple_of(pl.program_id(1) * tt, 8)

    # hop rows t0 .. t0+tt+8 cover every frame of this time tile
    win = hops_ref[pl.ds(t0, tt + 8), :]                      # [tt+8, HOP]

    # frame t = hops[t] ++ hops[t+1] ++ hops[t+2][:80]  (tail rows of W are 0)
    z = jnp.dot(win[0:tt], w_ref[0:HOP_LENGTH, :],
                preferred_element_type=jnp.float32)           # [tt, 512]
    z = z + jnp.dot(win[1:tt + 1], w_ref[HOP_LENGTH:2 * HOP_LENGTH, :],
                    preferred_element_type=jnp.float32)
    z = z + jnp.dot(win[2:tt + 2], w_ref[2 * HOP_LENGTH:3 * HOP_LENGTH, :],
                    preferred_element_type=jnp.float32)

    r = z[:, :N_FREQ]
    im = z[:, N_FREQ:]
    power = jnp.clip(r * r + im * im, EPS, 1.0 / EPS)
    y = jnp.log(power + EPS)                                  # [tt, 256] f32
    # freq avg-pool (2,1) as a lane-dense MXU matmul (time-mean hoisted out)
    out_ref[...] = jnp.dot(y, pool_ref[...], preferred_element_type=jnp.float32)


def tf_spectrogram(x, tile_t=None):
    orig_dtype = x.dtype
    x = x.astype(jnp.float32)
    B, L = x.shape
    pad = HOP_LENGTH // 2
    T = (L + 2 * pad - WIN_LENGTH) // HOP_LENGTH + 1
    assert T >= 1

    if tile_t is None:
        n_t_tiles = pl.cdiv(T, 256)
        tile_t = _round_up(pl.cdiv(T, n_t_tiles), 8)
    else:
        tile_t = _round_up(max(int(tile_t), 8), 8)
    n_t_tiles = pl.cdiv(T, tile_t)
    t_pad = n_t_tiles * tile_t
    n_hops = t_pad + 8                         # +8 rows of lookahead (zeros)

    # pre-emphasis, conv-style zero padding, reshape to hop rows (no gather,
    # no frame inflation in HBM)
    xp = preemphasis(x)
    total = n_hops * HOP_LENGTH                # always >= L + pad (extra zeros)
    xp = jnp.pad(xp, ((0, 0), (pad, total - L - pad)))
    hops = xp.reshape(B, n_hops, HOP_LENGTH)   # [B, n_hops, 160]

    w_fused = build_fused_dft_weight()         # [480, 512]
    pool = build_pool_matrix()                 # [256, 128]

    out = pl.pallas_call(
        tf_spectrogram_kernel,
        out_shape=jax.ShapeDtypeStruct((B, t_pad, N_FREQ_POOLED), jnp.float32),
        grid_spec=pltpu.PrefetchScalarGridSpec(
            num_scalar_prefetch=0,
            grid=(B, n_t_tiles),
            in_specs=[
                # whole hop array per batch; block index constant over t -> one
                # DMA per batch, sliced in-kernel per time tile
                pl.BlockSpec((_SQUEEZE, n_hops, HOP_LENGTH),
                             lambda b, t: (b, 0, 0)),
                pl.BlockSpec((K_FUSED, 2 * N_FREQ), lambda b, t: (0, 0)),
                pl.BlockSpec((N_FREQ, N_FREQ_POOLED), lambda b, t: (0, 0)),
            ],
            out_specs=pl.BlockSpec((_SQUEEZE, tile_t, N_FREQ_POOLED),
                                   lambda b, t: (b, t, 0)),
        ),
        compiler_params=pltpu.CompilerParams(
            dimension_semantics=("parallel", "parallel")),
    )(hops, w_fused, pool)

    out = out[:, :T, :]                                    # drop padded frames
    out = out - jnp.mean(out, axis=1, keepdims=True)       # per-(B,freq) time mean
    out = jnp.transpose(out, (0, 2, 1))[:, None, :, :]     # NCHW [B,1,F/2,T]
    return out.astype(orig_dtype)


# ---------------- pure-JAX reference for verification ---------------------------
def _frame_signal_ref(x):
    pad = HOP_LENGTH // 2
    xp = jnp.pad(x, ((0, 0), (pad, pad)))
    L = xp.shape[1]
    T = (L - WIN_LENGTH) // HOP_LENGTH + 1
    idx = jnp.arange(T)[:, None] * HOP_LENGTH + jnp.arange(WIN_LENGTH)[None, :]
    return xp[:, idx]                                       # [B, T, WIN]


def tf_spectrogram_ref(x):
    x = x.astype(jnp.float32)
    frames = _frame_signal_ref(preemphasis(x))
    w = _hamming(WIN_LENGTH)
    s = np.arange(WIN_LENGTH, dtype=np.float64)[:, None]
    f = np.arange(N_FREQ, dtype=np.float64)[None, :]
    ang = 2.0 * np.pi * s * f / N_FFT
    wr = jnp.asarray((np.cos(ang) * w[:, None]).astype(np.float32))
    wi = jnp.asarray((np.sin(ang) * w[:, None]).astype(np.float32))
    r = jnp.einsum("btw,wf->btf", frames, wr, precision="highest")
    im = jnp.einsum("btw,wf->btf", frames, wi, precision="highest")
    p = jnp.clip(r * r + im * im, EPS, 1.0 / EPS)
    y = jnp.log(p + EPS)                                    # [B, T, F]
    y = y - jnp.mean(y, axis=1, keepdims=True)              # mean over time
    y = jnp.transpose(y, (0, 2, 1))                         # [B, F, T]
    y = 0.5 * (y[:, 0::2, :] + y[:, 1::2, :])               # AvgPool2d((2,1))
    return y[:, None, :, :]


if __name__ == "__main__":
    B = 2
    # L chosen so T = (L + hop - win)/hop + 1 = 16 frames
    L = WIN_LENGTH + 15 * HOP_LENGTH - HOP_LENGTH            # 2640
    key = jax.random.PRNGKey(0)
    x = jax.random.normal(key, (B, L), dtype=jnp.float32)

    ref = jax.block_until_ready(tf_spectrogram_ref(x))

    # exercise the tiled time axis (grid = (B, 2)) and the auto single tile
    out_tiled = jax.block_until_ready(tf_spectrogram(x, tile_t=8))
    out_auto = jax.block_until_ready(tf_spectrogram(x))

    assert out_tiled.shape == (B, 1, N_FREQ_POOLED, 16), out_tiled.shape
    assert out_auto.shape == (B, 1, N_FREQ_POOLED, 16), out_auto.shape
    assert out_tiled.dtype == jnp.float32
    np.testing.assert_allclose(np.asarray(out_tiled), np.asarray(ref),
                               rtol=1e-2, atol=1e-2)
    np.testing.assert_allclose(np.asarray(out_auto), np.asarray(ref),
                               rtol=1e-2, atol=1e-2)

    print("KERNEL_OK")
</pallas_src>

<mosaic_0001>
module attributes {stable_mosaic.version = 11 : i64} {
  func.func @tf_spectrogram_kernel(%arg0: i32, %arg1: i32, %arg2: memref<1x24x160xf32, #tpu.memory_space<vmem>>, %arg3: memref<480x512xf32, #tpu.memory_space<vmem>>, %arg4: memref<256x128xf32, #tpu.memory_space<vmem>>, %arg5: memref<1x8x128xf32, #tpu.memory_space<vmem>>) attributes {dimension_semantics = [#tpu.dimension_semantics<parallel>, #tpu.dimension_semantics<parallel>], iteration_bounds = array<i64: 2, 2>, scalar_prefetch = 0 : i64, scratch_operands = 0 : i64, tpu.core_type = #tpu.core_type<tc>, window_params = [{transform_indices = @transform_0, window_bounds = array<i64: 1, 24, 160>}, {pipeline_mode = #tpu.pipeline_mode<synchronous>, transform_indices = @transform_1, window_bounds = array<i64: 480, 512>}, {pipeline_mode = #tpu.pipeline_mode<synchronous>, transform_indices = @transform_2, window_bounds = array<i64: 256, 128>}, {transform_indices = @transform_3, window_bounds = array<i64: 1, 8, 128>}]} {
    %c8_i32 = arith.constant 8 : i32
    %0 = arith.muli %arg1, %c8_i32 : i32
    %1 = tpu.assume_multiple %0, 8 : i32
    %c0 = arith.constant 0 : index
    %2 = arith.index_cast %1 : i32 to index
    %c0_0 = arith.constant 0 : index
    %3 = vector.load %arg2[%c0, %2, %c0_0] : memref<1x24x160xf32, #tpu.memory_space<vmem>>, vector<1x16x160xf32>
    %4 = vector.shape_cast %3 : vector<1x16x160xf32> to vector<16x160xf32>
    %5 = vector.extract_strided_slice %4 {offsets = [0, 0], sizes = [8, 160], strides = [1, 1]} : vector<16x160xf32> to vector<8x160xf32>
    %c0_1 = arith.constant 0 : index
    %c0_2 = arith.constant 0 : index
    %6 = vector.load %arg3[%c0_1, %c0_2] : memref<480x512xf32, #tpu.memory_space<vmem>>, vector<160x512xf32>
    %cst = arith.constant dense<0.000000e+00> : vector<8x512xf32>
    %7 = tpu.matmul %5, %6, %cst {dimension_numbers = #tpu.dot_dimension_numbers<[1], [0], [0], [1], [0, 0, 1, 1], [], []>} : vector<8x160xf32>, vector<160x512xf32>, vector<8x512xf32> -> vector<8x512xf32>
    %8 = vector.extract_strided_slice %4 {offsets = [1, 0], sizes = [8, 160], strides = [1, 1]} : vector<16x160xf32> to vector<8x160xf32>
    %c160 = arith.constant 160 : index
    %c0_3 = arith.constant 0 : index
    %9 = vector.load %arg3[%c160, %c0_3] : memref<480x512xf32, #tpu.memory_space<vmem>>, vector<160x512xf32>
    %cst_4 = arith.constant dense<0.000000e+00> : vector<8x512xf32>
    %10 = tpu.matmul %8, %9, %cst_4 {dimension_numbers = #tpu.dot_dimension_numbers<[1], [0], [0], [1], [0, 0, 1, 1], [], []>} : vector<8x160xf32>, vector<160x512xf32>, vector<8x512xf32> -> vector<8x512xf32>
    %11 = arith.addf %7, %10 : vector<8x512xf32>
    %12 = vector.extract_strided_slice %4 {offsets = [2, 0], sizes = [8, 160], strides = [1, 1]} : vector<16x160xf32> to vector<8x160xf32>
    %c320 = arith.constant 320 : index
    %c0_5 = arith.constant 0 : index
    %13 = vector.load %arg3[%c320, %c0_5] : memref<480x512xf32, #tpu.memory_space<vmem>>, vector<160x512xf32>
    %cst_6 = arith.constant dense<0.000000e+00> : vector<8x512xf32>
    %14 = tpu.matmul %12, %13, %cst_6 {dimension_numbers = #tpu.dot_dimension_numbers<[1], [0], [0], [1], [0, 0, 1, 1], [], []>} : vector<8x160xf32>, vector<160x512xf32>, vector<8x512xf32> -> vector<8x512xf32>
    %15 = arith.addf %11, %14 : vector<8x512xf32>
    %16 = vector.extract_strided_slice %15 {offsets = [0, 0], sizes = [8, 256], strides = [1, 1]} : vector<8x512xf32> to vector<8x256xf32>
    %17 = vector.extract_strided_slice %15 {offsets = [0, 256], sizes = [8, 256], strides = [1, 1]} : vector<8x512xf32> to vector<8x256xf32>
    %18 = arith.mulf %16, %16 : vector<8x256xf32>
    %19 = arith.mulf %17, %17 : vector<8x256xf32>
    %20 = arith.addf %18, %19 : vector<8x256xf32>
    %cst_7 = arith.constant 9.99999993E-9 : f32
    %cst_8 = arith.constant 1.000000e+08 : f32
    %21 = vector.broadcast %cst_7 : f32 to vector<8x256xf32>
    %22 = arith.maximumf %21, %20 : vector<8x256xf32>
    %23 = vector.broadcast %cst_8 : f32 to vector<8x256xf32>
    %24 = arith.minimumf %23, %22 : vector<8x256xf32>
    %cst_9 = arith.constant 9.99999993E-9 : f32
    %25 = vector.broadcast %cst_9 : f32 to vector<8x256xf32>
    %26 = arith.addf %24, %25 : vector<8x256xf32>
    %27 = math.log %26 : vector<8x256xf32>
    %c0_10 = arith.constant 0 : index
    %c0_11 = arith.constant 0 : index
    %28 = vector.load %arg4[%c0_10, %c0_11] : memref<256x128xf32, #tpu.memory_space<vmem>>, vector<256x128xf32>
    %cst_12 = arith.constant dense<0.000000e+00> : vector<8x128xf32>
    %29 = tpu.matmul %27, %28, %cst_12 {dimension_numbers = #tpu.dot_dimension_numbers<[1], [0], [0], [1], [0, 0, 1, 1], [], []>} : vector<8x256xf32>, vector<256x128xf32>, vector<8x128xf32> -> vector<8x128xf32>
    %c0_13 = arith.constant 0 : index
    %c0_14 = arith.constant 0 : index
    %c0_15 = arith.constant 0 : index
    %30 = vector.load %arg5[%c0_13, %c0_14, %c0_15] : memref<1x8x128xf32, #tpu.memory_space<vmem>>, vector<1x8x128xf32>
    %31 = vector.shape_cast %30 : vector<1x8x128xf32> to vector<8x128xf32>
    %32 = vector.shape_cast %29 : vector<8x128xf32> to vector<1x8x128xf32>
    tpu.vector_store %arg5[%c0_13, %c0_14, %c0_15], %32 {strides = array<i32>} : memref<1x8x128xf32, #tpu.memory_space<vmem>>, vector<1x8x128xf32>,
    return
  }
  func.func @transform_0(%arg0: i32, %arg1: i32) -> (i32, i32, i32) {
    %c0_i32 = arith.constant 0 : i32
    %c0_i32_0 = arith.constant 0 : i32
    %c0_i32_1 = arith.constant 0 : i32
    return %arg0, %c0_i32, %c0_i32_0 : i32, i32, i32
  }
  func.func @transform_1(%arg0: i32, %arg1: i32) -> (i32, i32) {
    %c0_i32 = arith.constant 0 : i32
    %c0_i32_0 = arith.constant 0 : i32
    %c0_i32_1 = arith.constant 0 : i32
    return %c0_i32, %c0_i32_0 : i32, i32
  }
  func.func @transform_2(%arg0: i32, %arg1: i32) -> (i32, i32) {
    %c0_i32 = arith.constant 0 : i32
    %c0_i32_0 = arith.constant 0 : i32
    %c0_i32_1 = arith.constant 0 : i32
    return %c0_i32, %c0_i32_0 : i32, i32
  }
  func.func @transform_3(%arg0: i32, %arg1: i32) -> (i32, i32, i32) {
    %c0_i32 = arith.constant 0 : i32
    %c0_i32_0 = arith.constant 0 : i32
    return %arg0, %arg1, %c0_i32 : i32, i32, i32
  }
}

</mosaic_0001>

<llo_original>
// kernel: tpu_custom_call.1
$region0: #{tpu_custom_call.1}
  #allocation0 [shape = 'u32[]', space=smem, size = 0x4, offset = 0x4, fixed_abs, tag = 'smem constant byte address 0x4 - core index']
  #allocation1 [shape = 'u32[144,128]{1,0:T(1,128)}', space=vmem, size = 0x12000, scoped, tag = 'internal scratch']
  %s0 = inlined_call_operand.hbm [shape: f32[2,24,160], index: 0, kind: input, shape index: {}]
  %s1 = inlined_call_operand.hbm [shape: f32[480,512], index: 1, kind: input, shape index: {}]
  %s2 = inlined_call_operand.hbm [shape: f32[256,128], index: 2, kind: input, shape index: {}]
  %s3 = inlined_call_operand.hbm [shape: f32[2,16,128], index: 3, kind: output, shape index: {}]
  %s4 = sld [smem:[#allocation0]]
  $region57: #{tpu_custom_call.1} parent=0
    _
  %s6 = ssub.s32 1, %s4
  %s7 = scalar_select 0, %s6, %s4
  $region1: #{tpu_custom_call.1} parent=0
    #allocation2 [shape = 'u8[49152]{0}', space=vmem, size = 0xc000, scoped, tag = 'input window, operand 0']
    #allocation3 [shape = 's32[2]{0}', space=sflag, size = 0x8, scoped, tag = 'scoped memory for tpu_custom_call.1']
    #allocation4 [shape = 's32[2]{0}', space=sflag, size = 0x8, scoped, tag = 'scoped memory for tpu_custom_call.1']
    #allocation5 [shape = 'u8[983040]{0}', space=vmem, size = 0xf0000, scoped, tag = 'input window, operand 1, single buffered']
    #allocation6 [shape = 's32[1]{0}', space=sflag, size = 0x4, scoped, tag = 'scoped memory for tpu_custom_call.1']
    #allocation7 [shape = 'u8[131072]{0}', space=vmem, size = 0x20000, scoped, tag = 'input window, operand 2, single buffered']
    #allocation8 [shape = 'u8[8192]{0}', space=vmem, size = 0x2000, scoped, tag = 'output window, operand 0']
    %8 = vsyncpa [#allocation3], 0
    %s9 = scalar_lea.sflag [#allocation3], 1
    %10 = vsyncpa %s9, 0
    %11 = vsyncpa [#allocation6], 0
    %12 = vsyncpa [#allocation4], 0
    %s13 = scalar_lea.sflag [#allocation4], 1
    %14 = vsyncpa %s13, 0
    loop: start=0, step=1, limit=6
    $region2: #{tpu_custom_call.1} parent=1 // loop_pre_header
      _
    $region3: #{tpu_custom_call.1} parent=1 // loop_header
      %s16 = sphi 0, %s20
      %p17 = scmp.ge.s32.totalorder %s16, 6
      %s23 = sphi 0, %s35
      %s24 = sphi 0, %s31
      %s25 = sphi 0, %s23
      %s26 = sphi 0, %s24
      %s27 = sphi 0, %s25
      %s28 = sphi 0, %s26
      %s38 = sphi 0, %s40
      %s41 = sphi 0, %s38
      %s42 = sphi 0, %s41
      %s58 = sphi 0, %s42
      %s62 = sphi 0, %s62
      %s64 = sphi 0, %s62
      %s65 = sphi 0, %s64
      %s79 = sphi 0, %s65
      %s83 = sphi 0, %s83
      %s85 = sphi 0, %s83
      %s86 = sphi 0, %s85
      %s100 = sphi 0, %s86
      %s108 = sphi 0, %s110
      %s111 = sphi 0, %s108
      %s112 = sphi 0, %s111
      %s128 = sphi 0, %s112
    $region4: #{tpu_custom_call.1} parent=1 // loop_header_branch
      %19 = sbr.rel (%p17) target = $region8
    $region5: #{tpu_custom_call.1} parent=1 // loop_body
      %s21 = ssub.s32 %s16, 1
      %s22 = ssub.s32 %s16, 2
      %s29 = sadd.s32 1, %s24
      %p30 = scmp.ge.s32.totalorder %s29, 2
      %s31 = scalar_select %p30, 0, %s29
      %s32 = sadd.s32 1, %s23
      %s33 = scalar_select %p30, %s32, %s23
      %p34 = scmp.ge.s32.totalorder %s33, 2
      %s35 = scalar_select %p34, 0, %s33
      %s36 = ssub.s32 %s23, %s35
      %p37 = scmp.eq.s32.totalorder %s36, 0
      %s39 = sadd.s32 %s38, 1
      %s40 = scalar_select %p37, %s38, %s39
      %p43 = pneg %p37
      %p44 = scmp.eq.s32.totalorder %s16, 3
      %p45 = por %p43, %p44
      %p46 = scmp.ne.s32.totalorder %s38, %s41
      %p47 = scmp.eq.s32.totalorder %s16, 0
      %p48 = por %p46, %p47
      %p49 = scmp.ne.s32.totalorder %s38, %s41
      %p50 = scmp.eq.s32.totalorder %s21, 3
      %p51 = por %p49, %p50
      %p52 = scmp.ne.s32.totalorder %s41, %s42
      %p53 = scmp.eq.s32.totalorder %s21, 0
      %p54 = por %p52, %p53
      %p55 = scmp.ne.s32.totalorder %s41, %s42
      %p56 = scmp.eq.s32.totalorder %s22, 3
      %p57 = por %p55, %p56
      %p59 = scmp.ne.s32.totalorder %s42, %s58
      %p60 = scmp.eq.s32.totalorder %s22, 0
      %p61 = por %p59, %p60
      %s63 = sadd.s32 %s62, 1
      %p66 = scmp.eq.s32.totalorder %s16, 3
      %p67 = scmp.ne.s32.totalorder %s62, %s64
      %p68 = scmp.eq.s32.totalorder %s16, 0
      %p69 = por %p67, %p68
      %p70 = scmp.ne.s32.totalorder %s62, %s64
      %p71 = scmp.eq.s32.totalorder %s21, 3
      %p72 = por %p70, %p71
      %p73 = scmp.ne.s32.totalorder %s64, %s65
      %p74 = scmp.eq.s32.totalorder %s21, 0
      %p75 = por %p73, %p74
      %p76 = scmp.ne.s32.totalorder %s64, %s65
      %p77 = scmp.eq.s32.totalorder %s22, 3
      %p78 = por %p76, %p77
      %p80 = scmp.ne.s32.totalorder %s65, %s79
      %p81 = scmp.eq.s32.totalorder %s22, 0
      %p82 = por %p80, %p81
      %s84 = sadd.s32 %s83, 1
      %p87 = scmp.eq.s32.totalorder %s16, 3
      %p88 = scmp.ne.s32.totalorder %s83, %s85
      %p89 = scmp.eq.s32.totalorder %s16, 0
      %p90 = por %p88, %p89
      %p91 = scmp.ne.s32.totalorder %s83, %s85
      %p92 = scmp.eq.s32.totalorder %s21, 3
      %p93 = por %p91, %p92
      %p94 = scmp.ne.s32.totalorder %s85, %s86
      %p95 = scmp.eq.s32.totalorder %s21, 0
      %p96 = por %p94, %p95
      %p97 = scmp.ne.s32.totalorder %s85, %s86
      %p98 = scmp.eq.s32.totalorder %s22, 3
      %p99 = por %p97, %p98
      %p101 = scmp.ne.s32.totalorder %s86, %s100
      %p102 = scmp.eq.s32.totalorder %s22, 0
      %p103 = por %p101, %p102
      %s104 = ssub.s32 %s23, %s35
      %s105 = ssub.s32 %s24, %s31
      %s106 = sor.u32 %s104, %s105
      %p107 = scmp.eq.s32.totalorder %s106, 0
      %s109 = sadd.s32 %s108, 1
      %s110 = scalar_select %p107, %s108, %s109
      %p113 = pneg %p107
      %p114 = scmp.eq.s32.totalorder %s16, 3
      %p115 = por %p113, %p114
      %p116 = scmp.ne.s32.totalorder %s108, %s111
      %p117 = scmp.eq.s32.totalorder %s16, 0
      %p118 = por %p116, %p117
      %p119 = scmp.ne.s32.totalorder %s108, %s111
      %p120 = scmp.eq.s32.totalorder %s21, 3
      %p121 = por %p119, %p120
      %p122 = scmp.ne.s32.totalorder %s111, %s112
      %p123 = scmp.eq.s32.totalorder %s21, 0
      %p124 = por %p122, %p123
      %p125 = scmp.ne.s32.totalorder %s111, %s112
      %p126 = scmp.eq.s32.totalorder %s22, 3
      %p127 = por %p125, %p126
      %p129 = scmp.ne.s32.totalorder %s112, %s128
      %p130 = scmp.eq.s32.totalorder %s22, 0
      %p131 = por %p129, %p130
      %p132 = scmp.le.s32.totalorder 1, %s16
      %p133 = scmp.lt.s32.totalorder %s16, 5
      %p134 = pnand %p132, %p133
      %p135 = pneg %p134
      // Predicated region
      $region9: #{tpu_custom_call.1} parent=5 // pred_check
        _
      $region10: #{tpu_custom_call.1} parent=5 // pred_check_branch
        %137 = sbr.rel (%p134) target = $region12
      $region11: #{tpu_custom_call.1} parent=5 // pred_region
        %s138 = ssub.s32 %s16, 1
        // Predicated region
        $region13: #{tpu_custom_call.1} parent=11 // pred_check
          %p139 = pneg %p75
        $region14: #{tpu_custom_call.1} parent=11 // pred_check_branch
          %141 = sbr.rel (%p139) target = $region16
        $region15: #{tpu_custom_call.1} parent=11 // pred_region
          %s143 = ssub.s32 30720, 30720
          %144 = vsyncadd [#allocation6], %s143
          %s145 = sshll.u32 [#allocation5], 4
          %s146 = int_to_ptr.vmem [resolvable:$true] %s145
          %151 = dma.hbm_to_vmem [thread:$0]  %s1, 30720, %s146, [#allocation6], 512, 512, 32
        $region16: #{tpu_custom_call.1} parent=11 // pred_fallthru
          _
        // Predicated region
        $region17: #{tpu_custom_call.1} parent=11 // pred_check
          %p152 = pneg %p96
        $region18: #{tpu_custom_call.1} parent=11 // pred_check_branch
          %154 = sbr.rel (%p152) target = $region20
        $region19: #{tpu_custom_call.1} parent=11 // pred_region
          %s156 = ssub.s32 4096, 4096
          %157 = vsyncadd [#allocation6], %s156
          %s158 = sshll.u32 [#allocation7], 4
          %s159 = int_to_ptr.vmem [resolvable:$true] %s158
          %164 = dma.hbm_to_vmem [thread:$0]  %s2, 4096, %s159, [#allocation6], 128, 128, 8
        $region20: #{tpu_custom_call.1} parent=11 // pred_fallthru
          _
      $region12: #{tpu_custom_call.1} parent=5 // pred_fallthru
        _
      %p165 = scmp.lt.s32.totalorder %s16, 4
      // Predicated region
      $region21: #{tpu_custom_call.1} parent=5 // pred_check
        %p166 = pneg %p165
      $region22: #{tpu_custom_call.1} parent=5 // pred_check_branch
        %168 = sbr.rel (%p166) target = $region24
      $region23: #{tpu_custom_call.1} parent=5 // pred_region
        // Predicated region
        $region25: #{tpu_custom_call.1} parent=23 // pred_check
          %p169 = pneg %p48
        $region26: #{tpu_custom_call.1} parent=23 // pred_check_branch
          %171 = sbr.rel (%p169) target = $region28
        $region27: #{tpu_custom_call.1} parent=23 // pred_region
          %s172 = sand.u32 %s38, 1
          %s173 = scalar_lea.sflag [#allocation3], %s172
          %s174 = sand.u32 %s38, 1
          %s175 = smul.addr %s174, 48
          %s176 = scalar_lea.vmem [#allocation2], %s175
          %s178 = ssub.s32 768, 768
          %179 = vsyncadd %s173, %s178
          %s180 = smul.addr %s23, 6
          %s181 = smul.addr %s180, 128
          %s182 = scalar_lea.hbm %s0, %s181
          %s183 = sshll.u32 %s176, 4
          %s184 = int_to_ptr.vmem [resolvable:$true] %s183
          %189 = dma.hbm_to_vmem [thread:$0]  %s182, 768, %s184, %s173, 256, 256, 16
        $region28: #{tpu_custom_call.1} parent=23 // pred_fallthru
          _
      $region24: #{tpu_custom_call.1} parent=5 // pred_fallthru
        _
      %p190 = scmp.le.s32.totalorder 1, %s16
      %p191 = scmp.lt.s32.totalorder %s16, 5
      %p192 = pnand %p190, %p191
      %p193 = pneg %p192
      // Predicated region
      $region29: #{tpu_custom_call.1} parent=5 // pred_check
        _
      $region30: #{tpu_custom_call.1} parent=5 // pred_check_branch
        %195 = sbr.rel (%p192) target = $region32
      $region31: #{tpu_custom_call.1} parent=5 // pred_region
        %s196 = ssub.s32 %s16, 1
        %s197 = sand.u32 %s41, 1
        %s198 = scalar_lea.sflag [#allocation3], %s197
        %s199 = sand.u32 %s41, 1
        %s200 = smul.addr %s199, 48
        %s201 = scalar_lea.vmem [#allocation2], %s200
        // Predicated region
        $region33: #{tpu_custom_call.1} parent=31 // pred_check
          %p202 = pneg %p54
        $region34: #{tpu_custom_call.1} parent=31 // pred_check_branch
          %204 = sbr.rel (%p202) target = $region36
        $region35: #{tpu_custom_call.1} parent=31 // pred_region
          %205 = dma.done %s198, 768
        $region36: #{tpu_custom_call.1} parent=31 // pred_fallthru
          _
        // Predicated region
        $region37: #{tpu_custom_call.1} parent=31 // pred_check
          %p206 = pneg %p75
        $region38: #{tpu_custom_call.1} parent=31 // pred_check_branch
          %208 = sbr.rel (%p206) target = $region40
        $region39: #{tpu_custom_call.1} parent=31 // pred_region
          %209 = dma.done [#allocation6], 30720
        $region40: #{tpu_custom_call.1} parent=31 // pred_fallthru
          _
        // Predicated region
        $region41: #{tpu_custom_call.1} parent=31 // pred_check
          %p210 = pneg %p96
        $region42: #{tpu_custom_call.1} parent=31 // pred_check_branch
          %212 = sbr.rel (%p210) target = $region44
        $region43: #{tpu_custom_call.1} parent=31 // pred_region
          %213 = dma.done [#allocation6], 4096
        $region44: #{tpu_custom_call.1} parent=31 // pred_fallthru
          _
        %s214 = sand.u32 %s41, 1
        %s215 = scalar_lea.sflag [#allocation3], %s214
        %s216 = sand.u32 %s41, 1
        %s217 = smul.addr %s216, 48
        %s218 = scalar_lea.vmem [#allocation2], %s217
        %p219 = pneg %p54
        %p220 = pneg %p51
        %p221 = pneg %p75
        %p222 = pneg %p72
        %p223 = pneg %p96
        %p224 = pneg %p93
        %p225 = pneg %p124
        %p226 = pneg %p121
        %s227 = sand.u32 %s111, 1
        %s228 = scalar_lea.sflag [#allocation4], %s227
        %s229 = sand.u32 %s111, 1
        %s230 = smul.addr %s229, 8
        %s231 = scalar_lea.vmem [#allocation8], %s230
        %s232 = smul.u32 %s26, 8
        %s233 = sshra.s32 %s232, 3
        %s234 = sand.u32 %s232, 7
        %s235 = smul.u32 %s233, 2
        %s236 = smul.addr %s235, 8
        %s237 = scalar_lea.vmem %s201, %s236 [#allocation2]
        %v238 = vld [vmem:[%s237] sm:$0xff]
        %v239 = vld [vmem:[%s237 + $0x8] sm:$0xff]
        %v240 = vld [vmem:[%s237 + $0x10] sm:$0xff]
        %v241 = vld [vmem:[%s237 + $0x18] sm:$0xff]
        %v242 = vld [vmem:[#allocation5] sm:$0xff]
        %v243 = vld [vmem:[#allocation5 + $0x8] sm:$0xff]
        %v244 = vld [vmem:[#allocation5 + $0x10] sm:$0xff]
        %v245 = vld [vmem:[#allocation5 + $0x18] sm:$0xff]
        %v246 = vld [vmem:[#allocation5 + $0x20] sm:$0xff]
        %v247 = vld [vmem:[#allocation5 + $0x28] sm:$0xff]
        %v248 = vld [vmem:[#allocation5 + $0x30] sm:$0xff]
        %v249 = vld [vmem:[#allocation5 + $0x38] sm:$0xff]
        %v250 = vld [vmem:[#allocation5 + $0x40] sm:$0xff]
        %v251 = vld [vmem:[#allocation5 + $0x48] sm:$0xff]
        %v252 = vld [vmem:[#allocation5 + $0x50] sm:$0xff]
        %v253 = vld [vmem:[#allocation5 + $0x58] sm:$0xff]
        %v254 = vld [vmem:[#allocation5 + $0x60] sm:$0xff]
        %v255 = vld [vmem:[#allocation5 + $0x68] sm:$0xff]
        %v256 = vld [vmem:[#allocation5 + $0x70] sm:$0xff]
        %v257 = vld [vmem:[#allocation5 + $0x78] sm:$0xff]
        %v258 = vld [vmem:[#allocation5 + $0x80] sm:$0xff]
        %v259 = vld [vmem:[#allocation5 + $0x88] sm:$0xff]
        %v260 = vld [vmem:[#allocation5 + $0x90] sm:$0xff]
        %v261 = vld [vmem:[#allocation5 + $0x98] sm:$0xff]
        %v262 = vld [vmem:[#allocation5 + $0xa0] sm:$0xff]
        %v263 = vld [vmem:[#allocation5 + $0xa8] sm:$0xff]
        %v264 = vld [vmem:[#allocation5 + $0xb0] sm:$0xff]
        %v265 = vld [vmem:[#allocation5 + $0xb8] sm:$0xff]
        %v266 = vld [vmem:[#allocation5 + $0xc0] sm:$0xff]
        %v267 = vld [vmem:[#allocation5 + $0xc8] sm:$0xff]
        %v268 = vld [vmem:[#allocation5 + $0xd0] sm:$0xff]
        %v269 = vld [vmem:[#allocation5 + $0xd8] sm:$0xff]
        %v270 = vld [vmem:[#allocation5 + $0xe0] sm:$0xff]
        %v271 = vld [vmem:[#allocation5 + $0xe8] sm:$0xff]
        %v272 = vld [vmem:[#allocation5 + $0xf0] sm:$0xff]
        %v273 = vld [vmem:[#allocation5 + $0xf8] sm:$0xff]
        %v274 = vld [vmem:[#allocation5 + $0x100] sm:$0xff]
        %v275 = vld [vmem:[#allocation5 + $0x108] sm:$0xff]
        %v276 = vld [vmem:[#allocation5 + $0x110] sm:$0xff]
        %v277 = vld [vmem:[#allocation5 + $0x118] sm:$0xff]
        %v278 = vld [vmem:[#allocation5 + $0x120] sm:$0xff]
        %v279 = vld [vmem:[#allocation5 + $0x128] sm:$0xff]
        %v280 = vld [vmem:[#allocation5 + $0x130] sm:$0xff]
        %v281 = vld [vmem:[#allocation5 + $0x138] sm:$0xff]
        %v282 = vld [vmem:[#allocation5 + $0x140] sm:$0xff]
        %v283 = vld [vmem:[#allocation5 + $0x148] sm:$0xff]
        %v284 = vld [vmem:[#allocation5 + $0x150] sm:$0xff]
        %v285 = vld [vmem:[#allocation5 + $0x158] sm:$0xff]
        %v286 = vld [vmem:[#allocation5 + $0x160] sm:$0xff]
        %v287 = vld [vmem:[#allocation5 + $0x168] sm:$0xff]
        %v288 = vld [vmem:[#allocation5 + $0x170] sm:$0xff]
        %v289 = vld [vmem:[#allocation5 + $0x178] sm:$0xff]
        %v290 = vld [vmem:[#allocation5 + $0x180] sm:$0xff]
        %v291 = vld [vmem:[#allocation5 + $0x188] sm:$0xff]
        %v292 = vld [vmem:[#allocation5 + $0x190] sm:$0xff]
        %v293 = vld [vmem:[#allocation5 + $0x198] sm:$0xff]
        %v294 = vld [vmem:[#allocation5 + $0x1a0] sm:$0xff]
        %v295 = vld [vmem:[#allocation5 + $0x1a8] sm:$0xff]
        %v296 = vld [vmem:[#allocation5 + $0x1b0] sm:$0xff]
        %v297 = vld [vmem:[#allocation5 + $0x1b8] sm:$0xff]
        %v298 = vld [vmem:[#allocation5 + $0x1c0] sm:$0xff]
        %v299 = vld [vmem:[#allocation5 + $0x1c8] sm:$0xff]
        %v300 = vld [vmem:[#allocation5 + $0x1d0] sm:$0xff]
        %v301 = vld [vmem:[#allocation5 + $0x1d8] sm:$0xff]
        %v302 = vld [vmem:[#allocation5 + $0x1e0] sm:$0xff]
        %v303 = vld [vmem:[#allocation5 + $0x1e8] sm:$0xff]
        %v304 = vld [vmem:[#allocation5 + $0x1f0] sm:$0xff]
        %v305 = vld [vmem:[#allocation5 + $0x1f8] sm:$0xff]
        %v306 = vld [vmem:[#allocation5 + $0x200] sm:$0xff]
        %v307 = vld [vmem:[#allocation5 + $0x208] sm:$0xff]
        %v308 = vld [vmem:[#allocation5 + $0x210] sm:$0xff]
        %v309 = vld [vmem:[#allocation5 + $0x218] sm:$0xff]
        %v310 = vld [vmem:[#allocation5 + $0x220] sm:$0xff]
        %v311 = vld [vmem:[#allocation5 + $0x228] sm:$0xff]
        %v312 = vld [vmem:[#allocation5 + $0x230] sm:$0xff]
        %v313 = vld [vmem:[#allocation5 + $0x238] sm:$0xff]
        %v314 = vld [vmem:[#allocation5 + $0x240] sm:$0xff]
        %v315 = vld [vmem:[#allocation5 + $0x248] sm:$0xff]
        %v316 = vld [vmem:[#allocation5 + $0x250] sm:$0xff]
        %v317 = vld [vmem:[#allocation5 + $0x258] sm:$0xff]
        %v318 = vld [vmem:[#allocation5 + $0x260] sm:$0xff]
        %v319 = vld [vmem:[#allocation5 + $0x268] sm:$0xff]
        %v320 = vld [vmem:[#allocation5 + $0x270] sm:$0xff]
        %v321 = vld [vmem:[#allocation5 + $0x278] sm:$0xff]
        %v322 = vld [vmem:[#allocation5 + $0x280] sm:$0xff]
        %v323 = vld [vmem:[#allocation5 + $0x288] sm:$0xff]
        %v324 = vld [vmem:[#allocation5 + $0x290] sm:$0xff]
        %v325 = vld [vmem:[#allocation5 + $0x298] sm:$0xff]
        %v326 = vld [vmem:[#allocation5 + $0x2a0] sm:$0xff]
        %v327 = vld [vmem:[#allocation5 + $0x2a8] sm:$0xff]
        %v328 = vld [vmem:[#allocation5 + $0x2b0] sm:$0xff]
        %v329 = vld [vmem:[#allocation5 + $0x2b8] sm:$0xff]
        %v330 = vld [vmem:[#allocation5 + $0x2c0] sm:$0xff]
        %v331 = vld [vmem:[#allocation5 + $0x2c8] sm:$0xff]
        %v332 = vld [vmem:[#allocation5 + $0x2d0] sm:$0xff]
        %v333 = vld [vmem:[#allocation5 + $0x2d8] sm:$0xff]
        %v334 = vld [vmem:[#allocation5 + $0x2e0] sm:$0xff]
        %v335 = vld [vmem:[#allocation5 + $0x2e8] sm:$0xff]
        %v336 = vld [vmem:[#allocation5 + $0x2f0] sm:$0xff]
        %v337 = vld [vmem:[#allocation5 + $0x2f8] sm:$0xff]
        %v338 = vld [vmem:[#allocation5 + $0x300] sm:$0xff]
        %v339 = vld [vmem:[#allocation5 + $0x308] sm:$0xff]
        %v340 = vld [vmem:[#allocation5 + $0x310] sm:$0xff]
        %v341 = vld [vmem:[#allocation5 + $0x318] sm:$0xff]
        %v342 = vld [vmem:[#allocation5 + $0x320] sm:$0xff]
        %v343 = vld [vmem:[#allocation5 + $0x328] sm:$0xff]
        %v344 = vld [vmem:[#allocation5 + $0x330] sm:$0xff]
        %v345 = vld [vmem:[#allocation5 + $0x338] sm:$0xff]
        %v346 = vld [vmem:[#allocation5 + $0x340] sm:$0xff]
        %v347 = vld [vmem:[#allocation5 + $0x348] sm:$0xff]
        %v348 = vld [vmem:[#allocation5 + $0x350] sm:$0xff]
        %v349 = vld [vmem:[#allocation5 + $0x358] sm:$0xff]
        %v350 = vld [vmem:[#allocation5 + $0x360] sm:$0xff]
        %v351 = vld [vmem:[#allocation5 + $0x368] sm:$0xff]
        %v352 = vld [vmem:[#allocation5 + $0x370] sm:$0xff]
        %v353 = vld [vmem:[#allocation5 + $0x378] sm:$0xff]
        %v354 = vld [vmem:[#allocation5 + $0x380] sm:$0xff]
        %v355 = vld [vmem:[#allocation5 + $0x388] sm:$0xff]
        %v356 = vld [vmem:[#allocation5 + $0x390] sm:$0xff]
        %v357 = vld [vmem:[#allocation5 + $0x398] sm:$0xff]
        %v358 = vld [vmem:[#allocation5 + $0x3a0] sm:$0xff]
        %v359 = vld [vmem:[#allocation5 + $0x3a8] sm:$0xff]
        %v360 = vld [vmem:[#allocation5 + $0x3b0] sm:$0xff]
        %v361 = vld [vmem:[#allocation5 + $0x3b8] sm:$0xff]
        %v362 = vld [vmem:[#allocation5 + $0x3c0] sm:$0xff]
        %v363 = vld [vmem:[#allocation5 + $0x3c8] sm:$0xff]
        %v364 = vld [vmem:[#allocation5 + $0x3d0] sm:$0xff]
        %v365 = vld [vmem:[#allocation5 + $0x3d8] sm:$0xff]
        %v366 = vld [vmem:[#allocation5 + $0x3e0] sm:$0xff]
        %v367 = vld [vmem:[#allocation5 + $0x3e8] sm:$0xff]
        %v368 = vld [vmem:[#allocation5 + $0x3f0] sm:$0xff]
        %v369 = vld [vmem:[#allocation5 + $0x3f8] sm:$0xff]
        %v370 = vld [vmem:[#allocation5 + $0x400] sm:$0xff]
        %v371 = vld [vmem:[#allocation5 + $0x408] sm:$0xff]
        %v372 = vld [vmem:[#allocation5 + $0x410] sm:$0xff]
        %v373 = vld [vmem:[#allocation5 + $0x418] sm:$0xff]
        %v374 = vld [vmem:[#allocation5 + $0x420] sm:$0xff]
        %v375 = vld [vmem:[#allocation5 + $0x428] sm:$0xff]
        %v376 = vld [vmem:[#allocation5 + $0x430] sm:$0xff]
        %v377 = vld [vmem:[#allocation5 + $0x438] sm:$0xff]
        %v378 = vld [vmem:[#allocation5 + $0x440] sm:$0xff]
        %v379 = vld [vmem:[#allocation5 + $0x448] sm:$0xff]
        %v380 = vld [vmem:[#allocation5 + $0x450] sm:$0xff]
        %v381 = vld [vmem:[#allocation5 + $0x458] sm:$0xff]
        %v382 = vld [vmem:[#allocation5 + $0x460] sm:$0xff]
        %v383 = vld [vmem:[#allocation5 + $0x468] sm:$0xff]
        %v384 = vld [vmem:[#allocation5 + $0x470] sm:$0xff]
        %v385 = vld [vmem:[#allocation5 + $0x478] sm:$0xff]
        %v386 = vld [vmem:[#allocation5 + $0x480] sm:$0xff]
        %v387 = vld [vmem:[#allocation5 + $0x488] sm:$0xff]
        %v388 = vld [vmem:[#allocation5 + $0x490] sm:$0xff]
        %v389 = vld [vmem:[#allocation5 + $0x498] sm:$0xff]
        %v390 = vld [vmem:[#allocation5 + $0x4a0] sm:$0xff]
        %v391 = vld [vmem:[#allocation5 + $0x4a8] sm:$0xff]
        %v392 = vld [vmem:[#allocation5 + $0x4b0] sm:$0xff]
        %v393 = vld [vmem:[#allocation5 + $0x4b8] sm:$0xff]
        %v394 = vld [vmem:[#allocation5 + $0x4c0] sm:$0xff]
        %v395 = vld [vmem:[#allocation5 + $0x4c8] sm:$0xff]
        %v396 = vld [vmem:[#allocation5 + $0x4d0] sm:$0xff]
        %v397 = vld [vmem:[#allocation5 + $0x4d8] sm:$0xff]
        %v398 = vld [vmem:[#allocation5 + $0x4e0] sm:$0xff]
        %v399 = vld [vmem:[#allocation5 + $0x4e8] sm:$0xff]
        %v400 = vld [vmem:[#allocation5 + $0x4f0] sm:$0xff]
        %v401 = vld [vmem:[#allocation5 + $0x4f8] sm:$0xff]
        %vm406 = vcmask 1046528
        %v407 = vrot.slane %v238, 1
        %v408 = vrot.slane %v240, 1
        %v409 = vsel %vm406, %v407, %v408
        %v410 = vrot.slane %v239, 1
        %v411 = vrot.slane %v241, 1
        %v412 = vsel %vm406, %v410, %v411
        %vm414 = vcmask 261120
        %v415 = vsel %vm414, %v412, 0
        %417 = vmatprep.subr.mxu0 %v323
        %418 = vmatpush1.msra.mxu0 %v322
        %419 = vmatprep.subr.mxu0 %v327
        %420 = vmatpush1.msra.mxu0 %v326
        %421 = vmatprep.subr.mxu0 %v331
        %422 = vmatpush1.msra.mxu0 %v330
        %423 = vmatprep.subr.mxu0 %v335
        %424 = vmatpush1.msra.mxu0 %v334
        %425 = vmatprep.subr.mxu0 %v339
        %426 = vmatpush1.msra.mxu0 %v338
        %427 = vmatprep.subr.mxu0 %v343
        %428 = vmatpush1.msra.mxu0 %v342
        %429 = vmatprep.subr.mxu0 %v347
        %430 = vmatpush1.msra.mxu0 %v346
        %431 = vmatprep.subr.mxu0 %v351
        %432 = vmatpush1.msra.mxu0 %v350
        %433 = vmatprep.subr.mxu0 %v355
        %434 = vmatpush1.msra.mxu0 %v354
        %435 = vmatprep.subr.mxu0 %v359
        %436 = vmatpush1.msra.mxu0 %v358
        %437 = vmatprep.subr.mxu0 %v363
        %438 = vmatpush1.msra.mxu0 %v362
        %439 = vmatprep.subr.mxu0 %v367
        %440 = vmatpush1.msra.mxu0 %v366
        %441 = vmatprep.subr.mxu0 %v371
        %442 = vmatpush1.msra.mxu0 %v370
        %443 = vmatprep.subr.mxu0 %v375
        %444 = vmatpush1.msra.mxu0 %v374
        %445 = vmatprep.subr.mxu0 %v379
        %446 = vmatpush1.msra.mxu0 %v378
        %447 = vmatprep.subr.mxu0 %v383
        %448 = vmatpush1.msra.mxu0 %v382
        %449 = vmatprep.subr.mxu0 %v387
        %450 = vmatpush1.msra.mxu0 %v386
        %451 = vmatprep.subr.mxu0 %v391
        %452 = vmatpush1.msra.mxu0 %v390
        %453 = vmatprep.subr.mxu0 %v395
        %454 = vmatpush1.msra.mxu0 %v394
        %455 = vmatprep.subr.mxu0 %v399
        %456 = vmatpush1.msra.mxu0 %v398
        %457 = vmatprep.subr.mxu0 0.0
        %458 = vmatpush1.msra.mxu0 0.0
        %459 = vmatprep.subr.mxu0 0.0
        %460 = vmatpush1.msra.mxu0 0.0
        %461 = vmatprep.subr.mxu0 0.0
        %462 = vmatpush1.msra.mxu0 0.0
        %463 = vmatprep.subr.mxu0 0.0
        %464 = vmatpush1.msra.mxu0 0.0
        %465 = vmatprep.subr.mxu0 0.0
        %466 = vmatpush1.msra.mxu0 0.0
        %467 = vmatprep.subr.mxu0 0.0
        %468 = vmatpush1.msra.mxu0 0.0
        %469 = vmatprep.subr.mxu0 0.0
        %470 = vmatpush1.msra.mxu0 0.0
        %471 = vmatprep.subr.mxu0 0.0
        %472 = vmatpush1.msra.mxu0 0.0
        %473 = vmatprep.subr.mxu0 0.0
        %474 = vmatpush1.msra.mxu0 0.0
        %475 = vmatprep.subr.mxu0 0.0
        %476 = vmatpush1.msra.mxu0 0.0
        %477 = vmatprep.subr.mxu0 0.0
        %478 = vmatpush1.msra.mxu0 0.0
        %479 = vmatprep.subr.mxu0 0.0
        %480 = vmatpush1.msra.mxu0 0.0
        %481 = vmatprep.mubr.f32.mxu0 %v415
        %482 = vmatmul.mubr.f32.gmra.mrb[0].mxu0 %v409
        %v483 = vpop.f32.mrb[0].mxu0
        %v484 = vadd.f32 0.0, %v483
        %v485 = vpop.f32.mrb[0].mxu0
        %v486 = vadd.f32 0.0, %v485
        %487 = vdwg.mxu0
        %488 = vmatprep.subr.mxu0 %v325
        %489 = vmatpush1.msra.mxu0 %v324
        %490 = vmatprep.subr.mxu0 %v329
        %491 = vmatpush1.msra.mxu0 %v328
        %492 = vmatprep.subr.mxu0 %v333
        %493 = vmatpush1.msra.mxu0 %v332
        %494 = vmatprep.subr.mxu0 %v337
        %495 = vmatpush1.msra.mxu0 %v336
        %496 = vmatprep.subr.mxu0 %v341
        %497 = vmatpush1.msra.mxu0 %v340
        %498 = vmatprep.subr.mxu0 %v345
        %499 = vmatpush1.msra.mxu0 %v344
        %500 = vmatprep.subr.mxu0 %v349
        %501 = vmatpush1.msra.mxu0 %v348
        %502 = vmatprep.subr.mxu0 %v353
        %503 = vmatpush1.msra.mxu0 %v352
        %504 = vmatprep.subr.mxu0 %v357
        %505 = vmatpush1.msra.mxu0 %v356
        %506 = vmatprep.subr.mxu0 %v361
        %507 = vmatpush1.msra.mxu0 %v360
        %508 = vmatprep.subr.mxu0 %v365
        %509 = vmatpush1.msra.mxu0 %v364
        %510 = vmatprep.subr.mxu0 %v369
        %511 = vmatpush1.msra.mxu0 %v368
        %512 = vmatprep.subr.mxu0 %v373
        %513 = vmatpush1.msra.mxu0 %v372
        %514 = vmatprep.subr.mxu0 %v377
        %515 = vmatpush1.msra.mxu0 %v376
        %516 = vmatprep.subr.mxu0 %v381
        %517 = vmatpush1.msra.mxu0 %v380
        %518 = vmatprep.subr.mxu0 %v385
        %519 = vmatpush1.msra.mxu0 %v384
        %520 = vmatprep.subr.mxu0 %v389
        %521 = vmatpush1.msra.mxu0 %v388
        %522 = vmatprep.subr.mxu0 %v393
        %523 = vmatpush1.msra.mxu0 %v392
        %524 = vmatprep.subr.mxu0 %v397
        %525 = vmatpush1.msra.mxu0 %v396
        %526 = vmatprep.subr.mxu0 %v401
        %527 = vmatpush1.msra.mxu0 %v400
        %528 = vmatprep.subr.mxu0 0.0
        %529 = vmatpush1.msra.mxu0 0.0
        %530 = vmatprep.subr.mxu0 0.0
        %531 = vmatpush1.msra.mxu0 0.0
        %532 = vmatprep.subr.mxu0 0.0
        %533 = vmatpush1.msra.mxu0 0.0
        %534 = vmatprep.subr.mxu0 0.0
        %535 = vmatpush1.msra.mxu0 0.0
        %536 = vmatprep.subr.mxu0 0.0
        %537 = vmatpush1.msra.mxu0 0.0
        %538 = vmatprep.subr.mxu0 0.0
        %539 = vmatpush1.msra.mxu0 0.0
        %540 = vmatprep.subr.mxu0 0.0
        %541 = vmatpush1.msra.mxu0 0.0
        %542 = vmatprep.subr.mxu0 0.0
        %543 = vmatpush1.msra.mxu0 0.0
        %544 = vmatprep.subr.mxu0 0.0
        %545 = vmatpush1.msra.mxu0 0.0
        %546 = vmatprep.subr.mxu0 0.0
        %547 = vmatpush1.msra.mxu0 0.0
        %548 = vmatprep.subr.mxu0 0.0
        %549 = vmatpush1.msra.mxu0 0.0
        %550 = vmatprep.subr.mxu0 0.0
        %551 = vmatpush1.msra.mxu0 0.0
        %552 = vmatprep.mubr.f32.mxu0 %v415
        %553 = vmatmul.mubr.f32.gmra.mrb[0].mxu0 %v409
        %v554 = vpop.f32.mrb[0].mxu0
        %v555 = vadd.f32 0.0, %v554
        %v556 = vpop.f32.mrb[0].mxu0
        %v557 = vadd.f32 0.0, %v556
        %558 = vdwg.mxu0
        %v559 = vsel %vm414, %v239, 0
        %561 = vmatprep.subr.mxu0 %v243
        %562 = vmatpush1.msra.mxu0 %v242
        %563 = vmatprep.subr.mxu0 %v247
        %564 = vmatpush1.msra.mxu0 %v246
        %565 = vmatprep.subr.mxu0 %v251
        %566 = vmatpush1.msra.mxu0 %v250
        %567 = vmatprep.subr.mxu0 %v255
        %568 = vmatpush1.msra.mxu0 %v254
        %569 = vmatprep.subr.mxu0 %v259
        %570 = vmatpush1.msra.mxu0 %v258
        %571 = vmatprep.subr.mxu0 %v263
        %572 = vmatpush1.msra.mxu0 %v262
        %573 = vmatprep.subr.mxu0 %v267
        %574 = vmatpush1.msra.mxu0 %v266
        %575 = vmatprep.subr.mxu0 %v271
        %576 = vmatpush1.msra.mxu0 %v270
        %577 = vmatprep.subr.mxu0 %v275
        %578 = vmatpush1.msra.mxu0 %v274
        %579 = vmatprep.subr.mxu0 %v279
        %580 = vmatpush1.msra.mxu0 %v278
        %581 = vmatprep.subr.mxu0 %v283
        %582 = vmatpush1.msra.mxu0 %v282
        %583 = vmatprep.subr.mxu0 %v287
        %584 = vmatpush1.msra.mxu0 %v286
        %585 = vmatprep.subr.mxu0 %v291
        %586 = vmatpush1.msra.mxu0 %v290
        %587 = vmatprep.subr.mxu0 %v295
        %588 = vmatpush1.msra.mxu0 %v294
        %589 = vmatprep.subr.mxu0 %v299
        %590 = vmatpush1.msra.mxu0 %v298
        %591 = vmatprep.subr.mxu0 %v303
        %592 = vmatpush1.msra.mxu0 %v302
        %593 = vmatprep.subr.mxu0 %v307
        %594 = vmatpush1.msra.mxu0 %v306
        %595 = vmatprep.subr.mxu0 %v311
        %596 = vmatpush1.msra.mxu0 %v310
        %597 = vmatprep.subr.mxu0 %v315
        %598 = vmatpush1.msra.mxu0 %v314
        %599 = vmatprep.subr.mxu0 %v319
        %600 = vmatpush1.msra.mxu0 %v318
        %601 = vmatprep.subr.mxu0 0.0
        %602 = vmatpush1.msra.mxu0 0.0
        %603 = vmatprep.subr.mxu0 0.0
        %604 = vmatpush1.msra.mxu0 0.0
        %605 = vmatprep.subr.mxu0 0.0
        %606 = vmatpush1.msra.mxu0 0.0
        %607 = vmatprep.subr.mxu0 0.0
        %608 = vmatpush1.msra.mxu0 0.0
        %609 = vmatprep.subr.mxu0 0.0
        %610 = vmatpush1.msra.mxu0 0.0
        %611 = vmatprep.subr.mxu0 0.0
        %612 = vmatpush1.msra.mxu0 0.0
        %613 = vmatprep.subr.mxu0 0.0
        %614 = vmatpush1.msra.mxu0 0.0
        %615 = vmatprep.subr.mxu0 0.0
        %616 = vmatpush1.msra.mxu0 0.0
        %617 = vmatprep.subr.mxu0 0.0
        %618 = vmatpush1.msra.mxu0 0.0
        %619 = vmatprep.subr.mxu0 0.0
        %620 = vmatpush1.msra.mxu0 0.0
        %621 = vmatprep.subr.mxu0 0.0
        %622 = vmatpush1.msra.mxu0 0.0
        %623 = vmatprep.subr.mxu0 0.0
        %624 = vmatpush1.msra.mxu0 0.0
        %625 = vmatprep.mubr.f32.mxu0 %v559
        %626 = vmatmul.mubr.f32.gmra.mrb[0].mxu0 %v238
        %v627 = vpop.f32.mrb[0].mxu0
        %v628 = vadd.f32 %v484, %v627
        %v629 = vpop.f32.mrb[0].mxu0
        %v630 = vadd.f32 %v486, %v629
        %631 = vdwg.mxu0
        %632 = vmatprep.subr.mxu0 %v245
        %633 = vmatpush1.msra.mxu0 %v244
        %634 = vmatprep.subr.mxu0 %v249
        %635 = vmatpush1.msra.mxu0 %v248
        %636 = vmatprep.subr.mxu0 %v253
        %637 = vmatpush1.msra.mxu0 %v252
        %638 = vmatprep.subr.mxu0 %v257
        %639 = vmatpush1.msra.mxu0 %v256
        %640 = vmatprep.subr.mxu0 %v261
        %641 = vmatpush1.msra.mxu0 %v260
        %642 = vmatprep.subr.mxu0 %v265
        %643 = vmatpush1.msra.mxu0 %v264
        %644 = vmatprep.subr.mxu0 %v269
        %645 = vmatpush1.msra.mxu0 %v268
        %646 = vmatprep.subr.mxu0 %v273
        %647 = vmatpush1.msra.mxu0 %v272
        %648 = vmatprep.subr.mxu0 %v277
        %649 = vmatpush1.msra.mxu0 %v276
        %650 = vmatprep.subr.mxu0 %v281
        %651 = vmatpush1.msra.mxu0 %v280
        %652 = vmatprep.subr.mxu0 %v285
        %653 = vmatpush1.msra.mxu0 %v284
        %654 = vmatprep.subr.mxu0 %v289
        %655 = vmatpush1.msra.mxu0 %v288
        %656 = vmatprep.subr.mxu0 %v293
        %657 = vmatpush1.msra.mxu0 %v292
        %658 = vmatprep.subr.mxu0 %v297
        %659 = vmatpush1.msra.mxu0 %v296
        %660 = vmatprep.subr.mxu0 %v301
        %661 = vmatpush1.msra.mxu0 %v300
        %662 = vmatprep.subr.mxu0 %v305
        %663 = vmatpush1.msra.mxu0 %v304
        %664 = vmatprep.subr.mxu0 %v309
        %665 = vmatpush1.msra.mxu0 %v308
        %666 = vmatprep.subr.mxu0 %v313
        %667 = vmatpush1.msra.mxu0 %v312
        %668 = vmatprep.subr.mxu0 %v317
        %669 = vmatpush1.msra.mxu0 %v316
        %670 = vmatprep.subr.mxu0 %v321
        %671 = vmatpush1.msra.mxu0 %v320
        %672 = vmatprep.subr.mxu0 0.0
        %673 = vmatpush1.msra.mxu0 0.0
        %674 = vmatprep.subr.mxu0 0.0
        %675 = vmatpush1.msra.mxu0 0.0
        %676 = vmatprep.subr.mxu0 0.0
        %677 = vmatpush1.msra.mxu0 0.0
        %678 = vmatprep.subr.mxu0 0.0
        %679 = vmatpush1.msra.mxu0 0.0
        %680 = vmatprep.subr.mxu0 0.0
        %681 = vmatpush1.msra.mxu0 0.0
        %682 = vmatprep.subr.mxu0 0.0
        %683 = vmatpush1.msra.mxu0 0.0
        %684 = vmatprep.subr.mxu0 0.0
        %685 = vmatpush1.msra.mxu0 0.0
        %686 = vmatprep.subr.mxu0 0.0
        %687 = vmatpush1.msra.mxu0 0.0
        %688 = vmatprep.subr.mxu0 0.0
        %689 = vmatpush1.msra.mxu0 0.0
        %690 = vmatprep.subr.mxu0 0.0
        %691 = vmatpush1.msra.mxu0 0.0
        %692 = vmatprep.subr.mxu0 0.0
        %693 = vmatpush1.msra.mxu0 0.0
        %694 = vmatprep.subr.mxu0 0.0
        %695 = vmatpush1.msra.mxu0 0.0
        %696 = vmatprep.mubr.f32.mxu0 %v559
        %697 = vmatmul.mubr.f32.gmra.mrb[0].mxu0 %v238
        %v698 = vpop.f32.mrb[0].mxu0
        %v699 = vadd.f32 %v555, %v698
        %v700 = vpop.f32.mrb[0].mxu0
        %v701 = vadd.f32 %v557, %v700
        %702 = vdwg.mxu0
        %v703 = vld [vmem:[#allocation5 + $0x500] sm:$0xff]
        %v704 = vld [vmem:[#allocation5 + $0x508] sm:$0xff]
        %v705 = vld [vmem:[#allocation5 + $0x510] sm:$0xff]
        %v706 = vld [vmem:[#allocation5 + $0x518] sm:$0xff]
        %v707 = vld [vmem:[#allocation5 + $0x520] sm:$0xff]
        %v708 = vld [vmem:[#allocation5 + $0x528] sm:$0xff]
        %v709 = vld [vmem:[#allocation5 + $0x530] sm:$0xff]
        %v710 = vld [vmem:[#allocation5 + $0x538] sm:$0xff]
        %v711 = vld [vmem:[#allocation5 + $0x540] sm:$0xff]
        %v712 = vld [vmem:[#allocation5 + $0x548] sm:$0xff]
        %v713 = vld [vmem:[#allocation5 + $0x550] sm:$0xff]
        %v714 = vld [vmem:[#allocation5 + $0x558] sm:$0xff]
        %v715 = vld [vmem:[#allocation5 + $0x560] sm:$0xff]
        %v716 = vld [vmem:[#allocation5 + $0x568] sm:$0xff]
        %v717 = vld [vmem:[#allocation5 + $0x570] sm:$0xff]
        %v718 = vld [vmem:[#allocation5 + $0x578] sm:$0xff]
        %v719 = vld [vmem:[#allocation5 + $0x580] sm:$0xff]
        %v720 = vld [vmem:[#allocation5 + $0x588] sm:$0xff]
        %v721 = vld [vmem:[#allocation5 + $0x590] sm:$0xff]
        %v722 = vld [vmem:[#allocation5 + $0x598] sm:$0xff]
        %v723 = vld [vmem:[#allocation5 + $0x5a0] sm:$0xff]
        %v724 = vld [vmem:[#allocation5 + $0x5a8] sm:$0xff]
        %v725 = vld [vmem:[#allocation5 + $0x5b0] sm:$0xff]
        %v726 = vld [vmem:[#allocation5 + $0x5b8] sm:$0xff]
        %v727 = vld [vmem:[#allocation5 + $0x5c0] sm:$0xff]
        %v728 = vld [vmem:[#allocation5 + $0x5c8] sm:$0xff]
        %v729 = vld [vmem:[#allocation5 + $0x5d0] sm:$0xff]
        %v730 = vld [vmem:[#allocation5 + $0x5d8] sm:$0xff]
        %v731 = vld [vmem:[#allocation5 + $0x5e0] sm:$0xff]
        %v732 = vld [vmem:[#allocation5 + $0x5e8] sm:$0xff]
        %v733 = vld [vmem:[#allocation5 + $0x5f0] sm:$0xff]
        %v734 = vld [vmem:[#allocation5 + $0x5f8] sm:$0xff]
        %v735 = vld [vmem:[#allocation5 + $0x600] sm:$0xff]
        %v736 = vld [vmem:[#allocation5 + $0x608] sm:$0xff]
        %v737 = vld [vmem:[#allocation5 + $0x610] sm:$0xff]
        %v738 = vld [vmem:[#allocation5 + $0x618] sm:$0xff]
        %v739 = vld [vmem:[#allocation5 + $0x620] sm:$0xff]
        %v740 = vld [vmem:[#allocation5 + $0x628] sm:$0xff]
        %v741 = vld [vmem:[#allocation5 + $0x630] sm:$0xff]
        %v742 = vld [vmem:[#allocation5 + $0x638] sm:$0xff]
        %v743 = vld [vmem:[#allocation5 + $0x640] sm:$0xff]
        %v744 = vld [vmem:[#allocation5 + $0x648] sm:$0xff]
        %v745 = vld [vmem:[#allocation5 + $0x650] sm:$0xff]
        %v746 = vld [vmem:[#allocation5 + $0x658] sm:$0xff]
        %v747 = vld [vmem:[#allocation5 + $0x660] sm:$0xff]
        %v748 = vld [vmem:[#allocation5 + $0x668] sm:$0xff]
        %v749 = vld [vmem:[#allocation5 + $0x670] sm:$0xff]
        %v750 = vld [vmem:[#allocation5 + $0x678] sm:$0xff]
        %v751 = vld [vmem:[#allocation5 + $0x680] sm:$0xff]
        %v752 = vld [vmem:[#allocation5 + $0x688] sm:$0xff]
        %v753 = vld [vmem:[#allocation5 + $0x690] sm:$0xff]
        %v754 = vld [vmem:[#allocation5 + $0x698] sm:$0xff]
        %v755 = vld [vmem:[#allocation5 + $0x6a0] sm:$0xff]
        %v756 = vld [vmem:[#allocation5 + $0x6a8] sm:$0xff]
        %v757 = vld [vmem:[#allocation5 + $0x6b0] sm:$0xff]
        %v758 = vld [vmem:[#allocation5 + $0x6b8] sm:$0xff]
        %v759 = vld [vmem:[#allocation5 + $0x6c0] sm:$0xff]
        %v760 = vld [vmem:[#allocation5 + $0x6c8] sm:$0xff]
        %v761 = vld [vmem:[#allocation5 + $0x6d0] sm:$0xff]
        %v762 = vld [vmem:[#allocation5 + $0x6d8] sm:$0xff]
        %v763 = vld [vmem:[#allocation5 + $0x6e0] sm:$0xff]
        %v764 = vld [vmem:[#allocation5 + $0x6e8] sm:$0xff]
        %v765 = vld [vmem:[#allocation5 + $0x6f0] sm:$0xff]
        %v766 = vld [vmem:[#allocation5 + $0x6f8] sm:$0xff]
        %v767 = vld [vmem:[#allocation5 + $0x700] sm:$0xff]
        %v768 = vld [vmem:[#allocation5 + $0x708] sm:$0xff]
        %v769 = vld [vmem:[#allocation5 + $0x710] sm:$0xff]
        %v770 = vld [vmem:[#allocation5 + $0x718] sm:$0xff]
        %v771 = vld [vmem:[#allocation5 + $0x720] sm:$0xff]
        %v772 = vld [vmem:[#allocation5 + $0x728] sm:$0xff]
        %v773 = vld [vmem:[#allocation5 + $0x730] sm:$0xff]
        %v774 = vld [vmem:[#allocation5 + $0x738] sm:$0xff]
        %v775 = vld [vmem:[#allocation5 + $0x740] sm:$0xff]
        %v776 = vld [vmem:[#allocation5 + $0x748] sm:$0xff]
        %v777 = vld [vmem:[#allocation5 + $0x750] sm:$0xff]
        %v778 = vld [vmem:[#allocation5 + $0x758] sm:$0xff]
        %v779 = vld [vmem:[#allocation5 + $0x760] sm:$0xff]
        %v780 = vld [vmem:[#allocation5 + $0x768] sm:$0xff]
        %v781 = vld [vmem:[#allocation5 + $0x770] sm:$0xff]
        %v782 = vld [vmem:[#allocation5 + $0x778] sm:$0xff]
        %vm783 = vcmask 1045504
        %v784 = vrot.slane %v238, 2
        %v785 = vrot.slane %v240, 2
        %v786 = vsel %vm783, %v784, %v785
        %v787 = vrot.slane %v239, 2
        %v788 = vrot.slane %v241, 2
        %v789 = vsel %vm783, %v787, %v788
        %v791 = vsel %vm414, %v789, 0
        %793 = vmatprep.subr.mxu0 %v704
        %794 = vmatpush1.msra.mxu0 %v703
        %795 = vmatprep.subr.mxu0 %v708
        %796 = vmatpush1.msra.mxu0 %v707
        %797 = vmatprep.subr.mxu0 %v712
        %798 = vmatpush1.msra.mxu0 %v711
        %799 = vmatprep.subr.mxu0 %v716
        %800 = vmatpush1.msra.mxu0 %v715
        %801 = vmatprep.subr.mxu0 %v720
        %802 = vmatpush1.msra.mxu0 %v719
        %803 = vmatprep.subr.mxu0 %v724
        %804 = vmatpush1.msra.mxu0 %v723
        %805 = vmatprep.subr.mxu0 %v728
        %806 = vmatpush1.msra.mxu0 %v727
        %807 = vmatprep.subr.mxu0 %v732
        %808 = vmatpush1.msra.mxu0 %v731
        %809 = vmatprep.subr.mxu0 %v736
        %810 = vmatpush1.msra.mxu0 %v735
        %811 = vmatprep.subr.mxu0 %v740
        %812 = vmatpush1.msra.mxu0 %v739
        %813 = vmatprep.subr.mxu0 %v744
        %814 = vmatpush1.msra.mxu0 %v743
        %815 = vmatprep.subr.mxu0 %v748
        %816 = vmatpush1.msra.mxu0 %v747
        %817 = vmatprep.subr.mxu0 %v752
        %818 = vmatpush1.msra.mxu0 %v751
        %819 = vmatprep.subr.mxu0 %v756
        %820 = vmatpush1.msra.mxu0 %v755
        %821 = vmatprep.subr.mxu0 %v760
        %822 = vmatpush1.msra.mxu0 %v759
        %823 = vmatprep.subr.mxu0 %v764
        %824 = vmatpush1.msra.mxu0 %v763
        %825 = vmatprep.subr.mxu0 %v768
        %826 = vmatpush1.msra.mxu0 %v767
        %827 = vmatprep.subr.mxu0 %v772
        %828 = vmatpush1.msra.mxu0 %v771
        %829 = vmatprep.subr.mxu0 %v776
        %830 = vmatpush1.msra.mxu0 %v775
        %831 = vmatprep.subr.mxu0 %v780
        %832 = vmatpush1.msra.mxu0 %v779
        %833 = vmatprep.subr.mxu0 0.0
        %834 = vmatpush1.msra.mxu0 0.0
        %835 = vmatprep.subr.mxu0 0.0
        %836 = vmatpush1.msra.mxu0 0.0
        %837 = vmatprep.subr.mxu0 0.0
        %838 = vmatpush1.msra.mxu0 0.0
        %839 = vmatprep.subr.mxu0 0.0
        %840 = vmatpush1.msra.mxu0 0.0
        %841 = vmatprep.subr.mxu0 0.0
        %842 = vmatpush1.msra.mxu0 0.0
        %843 = vmatprep.subr.mxu0 0.0
        %844 = vmatpush1.msra.mxu0 0.0
        %845 = vmatprep.subr.mxu0 0.0
        %846 = vmatpush1.msra.mxu0 0.0
        %847 = vmatprep.subr.mxu0 0.0
        %848 = vmatpush1.msra.mxu0 0.0
        %849 = vmatprep.subr.mxu0 0.0
        %850 = vmatpush1.msra.mxu0 0.0
        %851 = vmatprep.subr.mxu0 0.0
        %852 = vmatpush1.msra.mxu0 0.0
        %853 = vmatprep.subr.mxu0 0.0
        %854 = vmatpush1.msra.mxu0 0.0
        %855 = vmatprep.subr.mxu0 0.0
        %856 = vmatpush1.msra.mxu0 0.0
        %857 = vmatprep.mubr.f32.mxu0 %v791
        %858 = vmatmul.mubr.f32.gmra.mrb[0].mxu0 %v786
        %v859 = vpop.f32.mrb[0].mxu0
        %v860 = vadd.f32 0.0, %v859
        %v861 = vpop.f32.mrb[0].mxu0
        %v862 = vadd.f32 0.0, %v861
        %863 = vdwg.mxu0
        %864 = vmatprep.subr.mxu0 %v706
        %865 = vmatpush1.msra.mxu0 %v705
        %866 = vmatprep.subr.mxu0 %v710
        %867 = vmatpush1.msra.mxu0 %v709
        %868 = vmatprep.subr.mxu0 %v714
        %869 = vmatpush1.msra.mxu0 %v713
        %870 = vmatprep.subr.mxu0 %v718
        %871 = vmatpush1.msra.mxu0 %v717
        %872 = vmatprep.subr.mxu0 %v722
        %873 = vmatpush1.msra.mxu0 %v721
        %874 = vmatprep.subr.mxu0 %v726
        %875 = vmatpush1.msra.mxu0 %v725
        %876 = vmatprep.subr.mxu0 %v730
        %877 = vmatpush1.msra.mxu0 %v729
        %878 = vmatprep.subr.mxu0 %v734
        %879 = vmatpush1.msra.mxu0 %v733
        %880 = vmatprep.subr.mxu0 %v738
        %881 = vmatpush1.msra.mxu0 %v737
        %882 = vmatprep.subr.mxu0 %v742
        %883 = vmatpush1.msra.mxu0 %v741
        %884 = vmatprep.subr.mxu0 %v746
        %885 = vmatpush1.msra.mxu0 %v745
        %886 = vmatprep.subr.mxu0 %v750
        %887 = vmatpush1.msra.mxu0 %v749
        %888 = vmatprep.subr.mxu0 %v754
        %889 = vmatpush1.msra.mxu0 %v753
        %890 = vmatprep.subr.mxu0 %v758
        %891 = vmatpush1.msra.mxu0 %v757
        %892 = vmatprep.subr.mxu0 %v762
        %893 = vmatpush1.msra.mxu0 %v761
        %894 = vmatprep.subr.mxu0 %v766
        %895 = vmatpush1.msra.mxu0 %v765
        %896 = vmatprep.subr.mxu0 %v770
        %897 = vmatpush1.msra.mxu0 %v769
        %898 = vmatprep.subr.mxu0 %v774
        %899 = vmatpush1.msra.mxu0 %v773
        %900 = vmatprep.subr.mxu0 %v778
        %901 = vmatpush1.msra.mxu0 %v777
        %902 = vmatprep.subr.mxu0 %v782
        %903 = vmatpush1.msra.mxu0 %v781
        %904 = vmatprep.subr.mxu0 0.0
        %905 = vmatpush1.msra.mxu0 0.0
        %906 = vmatprep.subr.mxu0 0.0
        %907 = vmatpush1.msra.mxu0 0.0
        %908 = vmatprep.subr.mxu0 0.0
        %909 = vmatpush1.msra.mxu0 0.0
        %910 = vmatprep.subr.mxu0 0.0
        %911 = vmatpush1.msra.mxu0 0.0
        %912 = vmatprep.subr.mxu0 0.0
        %913 = vmatpush1.msra.mxu0 0.0
        %914 = vmatprep.subr.mxu0 0.0
        %915 = vmatpush1.msra.mxu0 0.0
        %916 = vmatprep.subr.mxu0 0.0
        %917 = vmatpush1.msra.mxu0 0.0
        %918 = vmatprep.subr.mxu0 0.0
        %919 = vmatpush1.msra.mxu0 0.0
        %920 = vmatprep.subr.mxu0 0.0
        %921 = vmatpush1.msra.mxu0 0.0
        %922 = vmatprep.subr.mxu0 0.0
        %923 = vmatpush1.msra.mxu0 0.0
        %924 = vmatprep.subr.mxu0 0.0
        %925 = vmatpush1.msra.mxu0 0.0
        %926 = vmatprep.subr.mxu0 0.0
        %927 = vmatpush1.msra.mxu0 0.0
        %928 = vmatprep.mubr.f32.mxu0 %v791
        %929 = vmatmul.mubr.f32.gmra.mrb[0].mxu0 %v786
        %v930 = vpop.f32.mrb[0].mxu0
        %v931 = vadd.f32 0.0, %v930
        %v932 = vpop.f32.mrb[0].mxu0
        %v933 = vadd.f32 0.0, %v932
        %934 = vdwg.mxu0
        %v935 = vadd.f32 %v628, %v860
        %v936 = vadd.f32 %v630, %v862
        %v937 = vadd.f32 %v699, %v931
        %v938 = vadd.f32 %v701, %v933
        %v939 = vmul.f32 %v935, %v935
        %v940 = vmul.f32 %v936, %v936
        %v941 = vmul.f32 %v937, %v937
        %v942 = vmul.f32 %v938, %v938
        %v943 = vadd.f32 %v939, %v941
        %v944 = vadd.f32 %v940, %v942
        %v945 = vmax.f32 %v943, 1e-08
        %v946 = vmax.f32 %v944, 1e-08
        %v947 = vmin.f32 %v945, 1e+08
        %v948 = vmin.f32 %v946, 1e+08
        %v949 = vadd.f32 %v947, 1e-08
        %v950 = vadd.f32 %v948, 1e-08
        %v951 = vlog2.pop %v949
        %v952 = vmul.f32 %v951, 0.6931472
        %v953 = vlog2.pop %v950
        %v954 = vmul.f32 %v953, 0.6931472
        %v955 = vld [vmem:[#allocation7] sm:$0xff]
        %v956 = vld [vmem:[#allocation7 + $0x8] sm:$0xff]
        %v957 = vld [vmem:[#allocation7 + $0x10] sm:$0xff]
        %v958 = vld [vmem:[#allocation7 + $0x18] sm:$0xff]
        %v959 = vld [vmem:[#allocation7 + $0x20] sm:$0xff]
        %v960 = vld [vmem:[#allocation7 + $0x28] sm:$0xff]
        %v961 = vld [vmem:[#allocation7 + $0x30] sm:$0xff]
        %v962 = vld [vmem:[#allocation7 + $0x38] sm:$0xff]
        %v963 = vld [vmem:[#allocation7 + $0x40] sm:$0xff]
        %v964 = vld [vmem:[#allocation7 + $0x48] sm:$0xff]
        %v965 = vld [vmem:[#allocation7 + $0x50] sm:$0xff]
        %v966 = vld [vmem:[#allocation7 + $0x58] sm:$0xff]
        %v967 = vld [vmem:[#allocation7 + $0x60] sm:$0xff]
        %v968 = vld [vmem:[#allocation7 + $0x68] sm:$0xff]
        %v969 = vld [vmem:[#allocation7 + $0x70] sm:$0xff]
        %v970 = vld [vmem:[#allocation7 + $0x78] sm:$0xff]
        %v971 = vld [vmem:[#allocation7 + $0x80] sm:$0xff]
        %v972 = vld [vmem:[#allocation7 + $0x88] sm:$0xff]
        %v973 = vld [vmem:[#allocation7 + $0x90] sm:$0xff]
        %v974 = vld [vmem:[#allocation7 + $0x98] sm:$0xff]
        %v975 = vld [vmem:[#allocation7 + $0xa0] sm:$0xff]
        %v976 = vld [vmem:[#allocation7 + $0xa8] sm:$0xff]
        %v977 = vld [vmem:[#allocation7 + $0xb0] sm:$0xff]
        %v978 = vld [vmem:[#allocation7 + $0xb8] sm:$0xff]
        %v979 = vld [vmem:[#allocation7 + $0xc0] sm:$0xff]
        %v980 = vld [vmem:[#allocation7 + $0xc8] sm:$0xff]
        %v981 = vld [vmem:[#allocation7 + $0xd0] sm:$0xff]
        %v982 = vld [vmem:[#allocation7 + $0xd8] sm:$0xff]
        %v983 = vld [vmem:[#allocation7 + $0xe0] sm:$0xff]
        %v984 = vld [vmem:[#allocation7 + $0xe8] sm:$0xff]
        %v985 = vld [vmem:[#allocation7 + $0xf0] sm:$0xff]
        %v986 = vld [vmem:[#allocation7 + $0xf8] sm:$0xff]
        %987 = vmatprep.subr.mxu0 0.0
        %988 = vmatpush1.msra.mxu0 %v955
        %989 = vmatprep.subr.mxu0 0.0
        %990 = vmatpush1.msra.mxu0 %v956
        %991 = vmatprep.subr.mxu0 0.0
        %992 = vmatpush1.msra.mxu0 %v957
        %993 = vmatprep.subr.mxu0 0.0
        %994 = vmatpush1.msra.mxu0 %v958
        %995 = vmatprep.subr.mxu0 0.0
        %996 = vmatpush1.msra.mxu0 %v959
        %997 = vmatprep.subr.mxu0 0.0
        %998 = vmatpush1.msra.mxu0 %v960
        %999 = vmatprep.subr.mxu0 0.0
        %1000 = vmatpush1.msra.mxu0 %v961
        %1001 = vmatprep.subr.mxu0 0.0
        %1002 = vmatpush1.msra.mxu0 %v962
        %1003 = vmatprep.subr.mxu0 0.0
        %1004 = vmatpush1.msra.mxu0 %v963
        %1005 = vmatprep.subr.mxu0 0.0
        %1006 = vmatpush1.msra.mxu0 %v964
        %1007 = vmatprep.subr.mxu0 0.0
        %1008 = vmatpush1.msra.mxu0 %v965
        %1009 = vmatprep.subr.mxu0 0.0
        %1010 = vmatpush1.msra.mxu0 %v966
        %1011 = vmatprep.subr.mxu0 0.0
        %1012 = vmatpush1.msra.mxu0 %v967
        %1013 = vmatprep.subr.mxu0 0.0
        %1014 = vmatpush1.msra.mxu0 %v968
        %1015 = vmatprep.subr.mxu0 0.0
        %1016 = vmatpush1.msra.mxu0 %v969
        %1017 = vmatprep.subr.mxu0 0.0
        %1018 = vmatpush1.msra.mxu0 %v970
        %1019 = vmatprep.subr.mxu0 0.0
        %1020 = vmatpush1.msra.mxu0 %v971
        %1021 = vmatprep.subr.mxu0 0.0
        %1022 = vmatpush1.msra.mxu0 %v972
        %1023 = vmatprep.subr.mxu0 0.0
        %1024 = vmatpush1.msra.mxu0 %v973
        %1025 = vmatprep.subr.mxu0 0.0
        %1026 = vmatpush1.msra.mxu0 %v974
        %1027 = vmatprep.subr.mxu0 0.0
        %1028 = vmatpush1.msra.mxu0 %v975
        %1029 = vmatprep.subr.mxu0 0.0
        %1030 = vmatpush1.msra.mxu0 %v976
        %1031 = vmatprep.subr.mxu0 0.0
        %1032 = vmatpush1.msra.mxu0 %v977
        %1033 = vmatprep.subr.mxu0 0.0
        %1034 = vmatpush1.msra.mxu0 %v978
        %1035 = vmatprep.subr.mxu0 0.0
        %1036 = vmatpush1.msra.mxu0 %v979
        %1037 = vmatprep.subr.mxu0 0.0
        %1038 = vmatpush1.msra.mxu0 %v980
        %1039 = vmatprep.subr.mxu0 0.0
        %1040 = vmatpush1.msra.mxu0 %v981
        %1041 = vmatprep.subr.mxu0 0.0
        %1042 = vmatpush1.msra.mxu0 %v982
        %1043 = vmatprep.subr.mxu0 0.0
        %1044 = vmatpush1.msra.mxu0 %v983
        %1045 = vmatprep.subr.mxu0 0.0
        %1046 = vmatpush1.msra.mxu0 %v984
        %1047 = vmatprep.subr.mxu0 0.0
        %1048 = vmatpush1.msra.mxu0 %v985
        %1049 = vmatprep.subr.mxu0 0.0
        %1050 = vmatpush1.msra.mxu0 %v986
        %1051 = vmatprep.mubr.f32.mxu0 %v954
        %1052 = vmatmul.mubr.f32.gmra.mrb[0].mxu0 %v952
        %v1053 = vpop.f32.mrb[0].mxu0
        %v1054 = vadd.f32 0.0, %v1053
        %v1055 = vpop.f32.mrb[0].mxu0
        %1056 = vdwg.mxu0
        %1057 = vst [vmem:[%s231] sm:$0xff] %v1054
        %s1058 = sand.u32 %s111, 1
        %s1059 = scalar_lea.sflag [#allocation4], %s1058
        %s1060 = sand.u32 %s111, 1
        %s1061 = smul.addr %s1060, 8
        %s1062 = scalar_lea.vmem [#allocation8], %s1061
        // Predicated region
        $region45: #{tpu_custom_call.1} parent=31 // pred_check
          %p1063 = pneg %p121
        $region46: #{tpu_custom_call.1} parent=31 // pred_check_branch
          %1065 = sbr.rel (%p1063) target = $region48
        $region47: #{tpu_custom_call.1} parent=31 // pred_region
          %s1067 = ssub.s32 128, 128
          %1068 = vsyncadd %s1059, %s1067
          %s1069 = smul.addr %s25, 2
          %s1070 = sadd.s32 %s26, %s1069
          %s1071 = smul.addr %s1070, 128
          %s1072 = scalar_lea.hbm %s3, %s1071
          %s1074 = sshll.u32 %s1062, 4
          %s1075 = int_to_ptr.vmem [resolvable:$true] %s1074
          %1077 = dma.vmem_to_hbm [thread:$0]  %s1075, 128, %s1072, %s1059
        $region48: #{tpu_custom_call.1} parent=31 // pred_fallthru
          _
      $region32: #{tpu_custom_call.1} parent=5 // pred_fallthru
        _
      %p1078 = scmp.le.s32.totalorder 2, %s16
      // Predicated region
      $region49: #{tpu_custom_call.1} parent=5 // pred_check
        %p1079 = pneg %p1078
      $region50: #{tpu_custom_call.1} parent=5 // pred_check_branch
        %1081 = sbr.rel (%p1079) target = $region52
      $region51: #{tpu_custom_call.1} parent=5 // pred_region
        %s1082 = ssub.s32 %s16, 2
        // Predicated region
        $region53: #{tpu_custom_call.1} parent=51 // pred_check
          %p1083 = pneg %p127
        $region54: #{tpu_custom_call.1} parent=51 // pred_check_branch
          %1085 = sbr.rel (%p1083) target = $region56
        $region55: #{tpu_custom_call.1} parent=51 // pred_region
          %s1086 = sand.u32 %s112, 1
          %s1087 = scalar_lea.sflag [#allocation4], %s1086
          %s1088 = sand.u32 %s112, 1
          %s1089 = smul.addr %s1088, 8
          %s1090 = scalar_lea.vmem [#allocation8], %s1089
          %1091 = dma.done %s1087, 128
        $region56: #{tpu_custom_call.1} parent=51 // pred_fallthru
          _
      $region52: #{tpu_custom_call.1} parent=5 // pred_fallthru
        _
    $region6: #{tpu_custom_call.1} parent=1 // loop_footer
      %s20 = sadd.s32 1, %s16
    $region7: #{tpu_custom_call.1} parent=1 // loop_footer_branch
      %15 = sbr.rel target = $region3
    $region8: #{tpu_custom_call.1} parent=1 // loop_exit
      _
    %1092 = vsyncpa [#allocation3], 1
    %s1093 = scalar_lea.sflag [#allocation3], 1
    %1094 = vsyncpa %s1093, 1
    %1095 = vsyncpa [#allocation6], 1
    %1096 = vsyncpa [#allocation4], 1
    %s1097 = scalar_lea.sflag [#allocation4], 1
    %1098 = vsyncpa %s1097, 1

</llo_original>
